<compile_context>
chip_gen: v7x
topology: tpu7x:2x2x1
jax: 0.10.0
libtpu: 0.0.40
codegen_flags: <defaults>
</compile_context>

<pallas_src>
import functools
import math

import jax
import jax.numpy as jnp
from jax.experimental import pallas as pl
from jax.experimental.pallas import tpu as pltpu


# ----------------------------- in-kernel math helpers -----------------------------

_SQRT_HALF = 0.7071067811865476


def _erf(x):
    # Abramowitz & Stegun 7.1.26 rational approximation (|err| ~ 1.5e-7).
    # The divide goes through the EUP approximate reciprocal (free-ish slot).
    a1, a2, a3, a4, a5 = (0.254829592, -0.284496736, 1.421413741,
                          -1.453152027, 1.061405429)
    p = 0.3275911
    sign = jnp.where(x >= 0.0, 1.0, -1.0)
    ax = jnp.abs(x)
    t = pl.reciprocal(1.0 + p * ax, approx=True)
    poly = ((((a5 * t + a4) * t + a3) * t + a2) * t + a1) * t
    return sign * (1.0 - poly * jnp.exp(-ax * ax))


def _gelu_exact(x):
    # Matches F.gelu(x) default (erf form): 0.5 * x * (1 + erf(x / sqrt(2)))
    return 0.5 * x * (1.0 + _erf(x * _SQRT_HALF))


# ----------------------------- kernel bodies -----------------------------

def _mlp_kernel_single(x_ref, w1_ref, b1_ref, w2_ref, b2_ref, o_ref):
    """Whole hidden dim resident: fc1 + GELU + fc2, no accumulator passes.

    x_ref  : (bt, in_dim) bf16     w1_ref : (in_dim, H) bf16   b1_ref : (1, H) f32
    w2_ref : (H, out_dim) bf16     b2_ref : (1, out_dim) f32   o_ref  : (bt, out_dim)
    """
    h = jnp.dot(x_ref[...], w1_ref[...], preferred_element_type=jnp.float32)
    h = _gelu_exact(h + b1_ref[...])
    out = jnp.dot(h.astype(w2_ref.dtype), w2_ref[...],
                  preferred_element_type=jnp.float32)
    o_ref[...] = (out + b2_ref[...]).astype(o_ref.dtype)


def _mlp_kernel_tiled(x_ref, w1_ref, b1_ref, w2_ref, b2_ref, o_ref, acc_ref):
    """Hidden dim tiled (reduction axis): f32 VMEM accumulator (P3 pattern)."""
    h_idx = pl.program_id(1)

    @pl.when(h_idx == 0)
    def _():
        acc_ref[...] = jnp.zeros_like(acc_ref)

    h = jnp.dot(x_ref[...], w1_ref[...], preferred_element_type=jnp.float32)
    h = _gelu_exact(h + b1_ref[...])
    acc_ref[...] += jnp.dot(h.astype(w2_ref.dtype), w2_ref[...],
                            preferred_element_type=jnp.float32)

    @pl.when(h_idx == pl.num_programs(1) - 1)
    def _():
        o_ref[...] = (acc_ref[...] + b2_ref[...]).astype(o_ref.dtype)


# ----------------------------- tiling / VMEM budgeting -----------------------------

def _round_up(v, m):
    return ((v + m - 1) // m) * m


def _tpu_vmem_bytes():
    try:
        info = pltpu.get_tpu_info()
        for attr in ("vmem_capacity_bytes", "vmem_bytes", "vmem_size_bytes"):
            v = getattr(info, attr, None)
            if v:
                return int(v)
    except Exception:
        pass
    return 64 << 20          # conservative fallback: smallest-VMEM part (v7x)


def _choose_tiles(T, in_dim, hidden, out_dim, xb, wb, ob):
    """Pick (token tile, hidden tile, vmem bytes needed, vmem capacity)."""
    vmem = _tpu_vmem_bytes()
    budget = int(vmem * 0.7)                        # leave compiler headroom
    bt_cap = 1024 if vmem >= (96 << 20) else 512    # 128 MiB parts vs 64 MiB (v7x)

    def need(bt, bh):
        blocks = (bt * in_dim * xb          # x tile
                  + in_dim * bh * wb        # w1 tile
                  + bh * 4                  # b1 (f32)
                  + bh * out_dim * wb       # w2 tile
                  + out_dim * 4             # b2 (f32)
                  + bt * out_dim * ob)      # out tile
        total = 2 * blocks                  # double-buffered pipeline
        if bh < hidden:
            total += bt * out_dim * 4       # f32 accumulator scratch
        return total

    # Token tile: whole T when it fits (rounded to 8 sublanes), else a big
    # 256-multiple tile (bt_cap is a multiple of 256 -> MXU-friendly rows).
    bt = _round_up(T, 8) if T <= bt_cap else bt_cap
    # Hidden tile: prefer the whole hidden dim so weights are DMA'd once.
    bh = hidden

    while need(bt, bh) > budget and bt > 256:
        bt = max(256, bt // 2)
    while need(bt, bh) > budget and bh > 512:
        bh = max(512, _round_up(bh // 2, 128))

    return bt, bh, need(bt, bh), vmem


# ----------------------------- forward wrapper -----------------------------

def mlp_forward(x, params, *, compute_dtype=jnp.bfloat16):
    """x: (..., in_dim) -> (..., out_dim).  Dropout is identity (p=0 / eval)."""
    # TODO(synk): dropout with p > 0 in training mode is not implemented (identity).
    lead = x.shape[:-1]
    in_dim = x.shape[-1]
    T = int(math.prod(lead)) if lead else 1
    out_dtype = x.dtype

    w1 = params["w1"].astype(compute_dtype)
    w2 = params["w2"].astype(compute_dtype)
    b1 = params["b1"].astype(jnp.float32).reshape(1, -1)
    b2 = params["b2"].astype(jnp.float32).reshape(1, -1)
    hidden = w1.shape[1]
    out_dim = w2.shape[1]

    x2 = x.reshape(T, in_dim).astype(compute_dtype)

    xb = jnp.dtype(compute_dtype).itemsize
    wb = xb
    ob = jnp.dtype(out_dtype).itemsize
    bt, bh, vmem_need, vmem_cap = _choose_tiles(T, in_dim, hidden, out_dim, xb, wb, ob)

    # Pad the token axis up to a tile multiple (never fall back to a giant block).
    Tp = _round_up(T, bt)
    if Tp != T:
        x2 = jnp.pad(x2, ((0, Tp - T), (0, 0)))

    single = bh >= hidden
    if single:
        hidden_p = hidden
        bh = hidden
    else:
        hidden_p = _round_up(hidden, bh)
        if hidden_p != hidden:
            # Zero-padded hidden units contribute exactly 0 (zero w2 rows).
            w1 = jnp.pad(w1, ((0, 0), (0, hidden_p - hidden)))
            b1 = jnp.pad(b1, ((0, 0), (0, hidden_p - hidden)))
            w2 = jnp.pad(w2, ((0, hidden_p - hidden), (0, 0)))

    flops = 2 * T * in_dim * hidden + 2 * T * hidden * out_dim
    bytes_accessed = int(x2.size * xb + w1.size * wb + w2.size * wb
                         + b1.size * 4 + b2.size * 4 + Tp * out_dim * ob)
    cost = pl.CostEstimate(flops=int(flops), transcendentals=int(T * hidden),
                           bytes_accessed=bytes_accessed)

    vmem_limit = int(min(max(int(vmem_need * 1.5) + (8 << 20), 32 << 20),
                         int(vmem_cap * 0.9)))

    if single:
        grid = (Tp // bt,)
        out = pl.pallas_call(
            _mlp_kernel_single,
            out_shape=jax.ShapeDtypeStruct((Tp, out_dim), out_dtype),
            grid_spec=pltpu.PrefetchScalarGridSpec(
                num_scalar_prefetch=0,
                grid=grid,
                in_specs=[
                    pl.BlockSpec((bt, in_dim), lambda t: (t, 0)),
                    pl.BlockSpec((in_dim, hidden_p), lambda t: (0, 0)),
                    pl.BlockSpec((1, hidden_p), lambda t: (0, 0)),
                    pl.BlockSpec((hidden_p, out_dim), lambda t: (0, 0)),
                    pl.BlockSpec((1, out_dim), lambda t: (0, 0)),
                ],
                out_specs=pl.BlockSpec((bt, out_dim), lambda t: (t, 0)),
            ),
            compiler_params=pltpu.CompilerParams(
                dimension_semantics=("parallel",),
                vmem_limit_bytes=vmem_limit),
            cost_estimate=cost,
        )(x2, w1, b1, w2, b2)
    else:
        grid = (Tp // bt, hidden_p // bh)
        out = pl.pallas_call(
            _mlp_kernel_tiled,
            out_shape=jax.ShapeDtypeStruct((Tp, out_dim), out_dtype),
            grid_spec=pltpu.PrefetchScalarGridSpec(
                num_scalar_prefetch=0,
                grid=grid,
                in_specs=[
                    pl.BlockSpec((bt, in_dim), lambda t, h: (t, 0)),
                    pl.BlockSpec((in_dim, bh), lambda t, h: (0, h)),
                    pl.BlockSpec((1, bh), lambda t, h: (0, h)),
                    pl.BlockSpec((bh, out_dim), lambda t, h: (h, 0)),
                    pl.BlockSpec((1, out_dim), lambda t, h: (0, 0)),
                ],
                out_specs=pl.BlockSpec((bt, out_dim), lambda t, h: (t, 0)),
                scratch_shapes=[pltpu.VMEM((bt, out_dim), jnp.float32)],
            ),
            compiler_params=pltpu.CompilerParams(
                dimension_semantics=("parallel", "arbitrary"),
                vmem_limit_bytes=vmem_limit),
            cost_estimate=cost,
        )(x2, w1, b1, w2, b2)

    if Tp != T:
        out = out[:T]
    return out.reshape(*lead, out_dim)


# ----------------------------- init & reference -----------------------------

def init_mlp_params(key, in_dim, out_dim, expansion=4):
    """Weights stored pre-transposed to (K, N) layout and in bf16 (compute dtype)."""
    hidden = out_dim * expansion
    k1, k2 = jax.random.split(key)
    return {
        "w1": (0.02 * jax.random.normal(k1, (in_dim, hidden), jnp.float32)
               ).astype(jnp.bfloat16),
        "b1": jnp.zeros((hidden,), jnp.float32),
        "w2": (0.02 * jax.random.normal(k2, (hidden, out_dim), jnp.float32)
               ).astype(jnp.bfloat16),
        "b2": jnp.zeros((out_dim,), jnp.float32),
    }


def mlp_reference(x, params):
    """Pure-JAX reference (exact GELU, f32 highest-precision matmuls)."""
    w1 = params["w1"].astype(jnp.float32)
    w2 = params["w2"].astype(jnp.float32)
    h = jnp.dot(x, w1, precision=jax.lax.Precision.HIGHEST) + params["b1"]
    h = jax.nn.gelu(h, approximate=False)
    return jnp.dot(h, w2, precision=jax.lax.Precision.HIGHEST) + params["b2"]


# ----------------------------- main -----------------------------

if __name__ == "__main__":
    IN_DIM = 128
    OUT_DIM = 128
    EXPANSION = 4          # hidden = 512
    BATCH, SEQ = 2, 8      # T = 16 token rows

    root = jax.random.PRNGKey(0)
    k_p, k_x = jax.random.split(root)
    params = init_mlp_params(k_p, IN_DIM, OUT_DIM, EXPANSION)
    x = jax.random.normal(k_x, (BATCH, SEQ, IN_DIM), jnp.float32)

    fwd = jax.jit(functools.partial(mlp_forward))
    out = fwd(x, params)
    jax.block_until_ready(out)

    assert out.shape == (BATCH, SEQ, OUT_DIM) and out.dtype == jnp.float32

    # Sanity check vs pure-JAX reference (loose tol: bf16 MXU matmuls + approx recip).
    ref = mlp_reference(x, params)
    err = float(jnp.max(jnp.abs(out - ref)))
    assert err < 1e-2, f"max abs err {err}"

    print("KERNEL_OK")
</pallas_src>

<mosaic_0001>
module attributes {stable_mosaic.version = 11 : i64} {
  func.func @_mlp_kernel_single(%arg0: i32, %arg1: memref<16x128xbf16, #tpu.memory_space<vmem>>, %arg2: memref<128x512xbf16, #tpu.memory_space<vmem>>, %arg3: memref<1x512xf32, #tpu.memory_space<vmem>>, %arg4: memref<512x128xbf16, #tpu.memory_space<vmem>>, %arg5: memref<1x128xf32, #tpu.memory_space<vmem>>, %arg6: memref<16x128xf32, #tpu.memory_space<vmem>>) attributes {dimension_semantics = [#tpu.dimension_semantics<parallel>], iteration_bounds = array<i64: 1>, scalar_prefetch = 0 : i64, scratch_operands = 0 : i64, tpu.core_type = #tpu.core_type<tc>, window_params = [{transform_indices = @transform_0, window_bounds = array<i64: 16, 128>}, {pipeline_mode = #tpu.pipeline_mode<synchronous>, transform_indices = @transform_1, window_bounds = array<i64: 128, 512>}, {pipeline_mode = #tpu.pipeline_mode<synchronous>, transform_indices = @transform_2, window_bounds = array<i64: 1, 512>}, {pipeline_mode = #tpu.pipeline_mode<synchronous>, transform_indices = @transform_3, window_bounds = array<i64: 512, 128>}, {pipeline_mode = #tpu.pipeline_mode<synchronous>, transform_indices = @transform_4, window_bounds = array<i64: 1, 128>}, {transform_indices = @transform_5, window_bounds = array<i64: 16, 128>}]} {
    %c0 = arith.constant 0 : index
    %c0_0 = arith.constant 0 : index
    %0 = vector.load %arg1[%c0, %c0_0] : memref<16x128xbf16, #tpu.memory_space<vmem>>, vector<16x128xbf16>
    %c0_1 = arith.constant 0 : index
    %c0_2 = arith.constant 0 : index
    %1 = vector.load %arg2[%c0_1, %c0_2] : memref<128x512xbf16, #tpu.memory_space<vmem>>, vector<128x512xbf16>
    %cst = arith.constant dense<0.000000e+00> : vector<16x512xf32>
    %2 = tpu.matmul %0, %1, %cst {dimension_numbers = #tpu.dot_dimension_numbers<[1], [0], [0], [1], [0, 0, 1, 1], [], []>} : vector<16x128xbf16>, vector<128x512xbf16>, vector<16x512xf32> -> vector<16x512xf32>
    %c0_3 = arith.constant 0 : index
    %c0_4 = arith.constant 0 : index
    %3 = vector.load %arg3[%c0_3, %c0_4] : memref<1x512xf32, #tpu.memory_space<vmem>>, vector<1x512xf32>
    %4 = vector.broadcast %3 : vector<1x512xf32> to vector<16x512xf32>
    %5 = arith.addf %2, %4 : vector<16x512xf32>
    %cst_5 = arith.constant 5.000000e-01 : f32
    %6 = vector.broadcast %cst_5 : f32 to vector<16x512xf32>
    %7 = arith.mulf %6, %5 : vector<16x512xf32>
    %cst_6 = arith.constant 0.707106769 : f32
    %8 = vector.broadcast %cst_6 : f32 to vector<16x512xf32>
    %9 = arith.mulf %5, %8 : vector<16x512xf32>
    %cst_7 = arith.constant 0.000000e+00 : f32
    %10 = vector.broadcast %cst_7 : f32 to vector<16x512xf32>
    %11 = arith.cmpf oge, %9, %10 : vector<16x512xf32>
    %cst_8 = arith.constant 1.000000e+00 : f32
    %cst_9 = arith.constant -1.000000e+00 : f32
    %12 = vector.broadcast %cst_8 : f32 to vector<16x512xf32>
    %13 = vector.broadcast %cst_9 : f32 to vector<16x512xf32>
    %14 = arith.select %11, %12, %13 : vector<16x512xi1>, vector<16x512xf32>
    %15 = math.absf %9 : vector<16x512xf32>
    %cst_10 = arith.constant 0.327591091 : f32
    %16 = vector.broadcast %cst_10 : f32 to vector<16x512xf32>
    %17 = arith.mulf %16, %15 : vector<16x512xf32>
    %cst_11 = arith.constant 1.000000e+00 : f32
    %18 = vector.broadcast %cst_11 : f32 to vector<16x512xf32>
    %19 = arith.addf %18, %17 : vector<16x512xf32>
    %20 = tpu.reciprocal %19 {approx = true} : vector<16x512xf32> -> vector<16x512xf32>
    %cst_12 = arith.constant 1.06140542 : f32
    %21 = vector.broadcast %cst_12 : f32 to vector<16x512xf32>
    %22 = arith.mulf %21, %20 : vector<16x512xf32>
    %cst_13 = arith.constant -1.45315206 : f32
    %23 = vector.broadcast %cst_13 : f32 to vector<16x512xf32>
    %24 = arith.addf %22, %23 : vector<16x512xf32>
    %25 = arith.mulf %24, %20 : vector<16x512xf32>
    %cst_14 = arith.constant 1.42141378 : f32
    %26 = vector.broadcast %cst_14 : f32 to vector<16x512xf32>
    %27 = arith.addf %25, %26 : vector<16x512xf32>
    %28 = arith.mulf %27, %20 : vector<16x512xf32>
    %cst_15 = arith.constant -0.284496725 : f32
    %29 = vector.broadcast %cst_15 : f32 to vector<16x512xf32>
    %30 = arith.addf %28, %29 : vector<16x512xf32>
    %31 = arith.mulf %30, %20 : vector<16x512xf32>
    %cst_16 = arith.constant 0.254829586 : f32
    %32 = vector.broadcast %cst_16 : f32 to vector<16x512xf32>
    %33 = arith.addf %31, %32 : vector<16x512xf32>
    %34 = arith.mulf %33, %20 : vector<16x512xf32>
    %cst_17 = arith.constant 0.000000e+00 : f32
    %35 = vector.broadcast %cst_17 : f32 to vector<16x512xf32>
    %36 = arith.subf %35, %15 : vector<16x512xf32>
    %37 = arith.mulf %36, %15 : vector<16x512xf32>
    %38 = math.exp %37 : vector<16x512xf32>
    %39 = arith.mulf %34, %38 : vector<16x512xf32>
    %cst_18 = arith.constant 1.000000e+00 : f32
    %40 = vector.broadcast %cst_18 : f32 to vector<16x512xf32>
    %41 = arith.subf %40, %39 : vector<16x512xf32>
    %42 = arith.mulf %14, %41 : vector<16x512xf32>
    %cst_19 = arith.constant 1.000000e+00 : f32
    %43 = vector.broadcast %cst_19 : f32 to vector<16x512xf32>
    %44 = arith.addf %43, %42 : vector<16x512xf32>
    %45 = arith.mulf %7, %44 : vector<16x512xf32>
    %46 = arith.truncf %45 : vector<16x512xf32> to vector<16x512xbf16>
    %c0_20 = arith.constant 0 : index
    %c0_21 = arith.constant 0 : index
    %47 = vector.load %arg4[%c0_20, %c0_21] : memref<512x128xbf16, #tpu.memory_space<vmem>>, vector<512x128xbf16>
    %cst_22 = arith.constant dense<0.000000e+00> : vector<16x128xf32>
    %48 = tpu.matmul %46, %47, %cst_22 {dimension_numbers = #tpu.dot_dimension_numbers<[1], [0], [0], [1], [0, 0, 1, 1], [], []>} : vector<16x512xbf16>, vector<512x128xbf16>, vector<16x128xf32> -> vector<16x128xf32>
    %c0_23 = arith.constant 0 : index
    %c0_24 = arith.constant 0 : index
    %49 = vector.load %arg5[%c0_23, %c0_24] : memref<1x128xf32, #tpu.memory_space<vmem>>, vector<1x128xf32>
    %50 = vector.broadcast %49 : vector<1x128xf32> to vector<16x128xf32>
    %51 = arith.addf %48, %50 : vector<16x128xf32>
    %c0_25 = arith.constant 0 : index
    %c0_26 = arith.constant 0 : index
    %52 = vector.load %arg6[%c0_25, %c0_26] : memref<16x128xf32, #tpu.memory_space<vmem>>, vector<16x128xf32>
    tpu.vector_store %arg6[%c0_25, %c0_26], %51 {strides = array<i32>} : memref<16x128xf32, #tpu.memory_space<vmem>>, vector<16x128xf32>,
    return
  }
  func.func @transform_0(%arg0: i32) -> (i32, i32) {
    %c0_i32 = arith.constant 0 : i32
    %c0_i32_0 = arith.constant 0 : i32
    return %arg0, %c0_i32 : i32, i32
  }
  func.func @transform_1(%arg0: i32) -> (i32, i32) {
    %c0_i32 = arith.constant 0 : i32
    %c0_i32_0 = arith.constant 0 : i32
    %c0_i32_1 = arith.constant 0 : i32
    return %c0_i32, %c0_i32_0 : i32, i32
  }
  func.func @transform_2(%arg0: i32) -> (i32, i32) {
    %c0_i32 = arith.constant 0 : i32
    %c0_i32_0 = arith.constant 0 : i32
    %c0_i32_1 = arith.constant 0 : i32
    return %c0_i32, %c0_i32_0 : i32, i32
  }
  func.func @transform_3(%arg0: i32) -> (i32, i32) {
    %c0_i32 = arith.constant 0 : i32
    %c0_i32_0 = arith.constant 0 : i32
    %c0_i32_1 = arith.constant 0 : i32
    return %c0_i32, %c0_i32_0 : i32, i32
  }
  func.func @transform_4(%arg0: i32) -> (i32, i32) {
    %c0_i32 = arith.constant 0 : i32
    %c0_i32_0 = arith.constant 0 : i32
    %c0_i32_1 = arith.constant 0 : i32
    return %c0_i32, %c0_i32_0 : i32, i32
  }
  func.func @transform_5(%arg0: i32) -> (i32, i32) {
    %c0_i32 = arith.constant 0 : i32
    %c0_i32_0 = arith.constant 0 : i32
    return %arg0, %c0_i32 : i32, i32
  }
}

</mosaic_0001>

<llo_original>
// kernel: mlp_forward.1
$region0: #{mlp_forward.1}
  #allocation0 [shape = 'u32[]', space=smem, size = 0x4, offset = 0x4, fixed_abs, tag = 'smem constant byte address 0x4 - core index']
  #allocation1 [shape = 'u32[144,128]{1,0:T(1,128)}', space=vmem, size = 0x12000, scoped, tag = 'internal scratch']
  %s0 = inlined_call_operand.vmem [shape: bf16[16,128], index: 0, kind: input, shape index: {}]
  %s1 = inlined_call_operand.hbm [shape: bf16[128,512], index: 1, kind: input, shape index: {}]
  %s2 = inlined_call_operand.vmem [shape: f32[1,512], index: 2, kind: input, shape index: {}]
  %s3 = inlined_call_operand.hbm [shape: bf16[512,128], index: 3, kind: input, shape index: {}]
  %s4 = inlined_call_operand.vmem [shape: f32[1,128], index: 4, kind: input, shape index: {}]
  %s5 = inlined_call_operand.hbm [shape: f32[16,128], index: 5, kind: output, shape index: {}]
  %s6 = sld [smem:[#allocation0]]
  $region38: #{mlp_forward.1} parent=0
    _
  %s8 = ssub.s32 1, %s6
  %s9 = scalar_select 0, %s8, %s6
  $region1: #{mlp_forward.1} parent=0
    #allocation2 [shape = 'u8[131072]{0}', space=vmem, size = 0x20000, scoped, tag = 'input window, operand 1, single buffered']
    #allocation3 [shape = 's32[1]{0}', space=sflag, size = 0x4, scoped, tag = 'scoped memory for mlp_forward.1']
    #allocation4 [shape = 's32[1]{0}', space=sflag, size = 0x4, scoped, tag = 'scoped memory for mlp_forward.1']
    #allocation5 [shape = 'u8[131072]{0}', space=vmem, size = 0x20000, scoped, tag = 'input window, operand 3, single buffered']
    #allocation6 [shape = 's32[1]{0}', space=sflag, size = 0x4, scoped, tag = 'scoped memory for mlp_forward.1']
    #allocation7 [shape = 'u8[8192]{0}', space=vmem, size = 0x2000, scoped, tag = 'output window, operand 0, single buffered']
    %10 = vsyncpa [#allocation3], 0
    %11 = vsyncpa [#allocation6], 0
    %12 = vsyncpa [#allocation4], 0
    // Predicated region
    $region2: #{mlp_forward.1} parent=1 // pred_check
      _
    $region3: #{mlp_forward.1} parent=1 // pred_check_branch
      %14 = sbr.rel (0) target = $region5
    $region4: #{mlp_forward.1} parent=1 // pred_region
      _
    $region5: #{mlp_forward.1} parent=1 // pred_fallthru
      _
    // Predicated region
    $region6: #{mlp_forward.1} parent=1 // pred_check
      _
    $region7: #{mlp_forward.1} parent=1 // pred_check_branch
      %16 = sbr.rel (0) target = $region9
    $region8: #{mlp_forward.1} parent=1 // pred_region
      %s18 = ssub.s32 4096, 4096
      %19 = vsyncadd [#allocation3], %s18
      %s20 = sshll.u32 [#allocation2], 4
      %s21 = int_to_ptr.vmem [resolvable:$true] %s20
      %26 = dma.hbm_to_vmem [thread:$0]  %s1, 4096, %s21, [#allocation3], 256, 256, 16
    $region9: #{mlp_forward.1} parent=1 // pred_fallthru
      _
    // Predicated region
    $region10: #{mlp_forward.1} parent=1 // pred_check
      _
    $region11: #{mlp_forward.1} parent=1 // pred_check_branch
      %28 = sbr.rel (0) target = $region13
    $region12: #{mlp_forward.1} parent=1 // pred_region
      _
    $region13: #{mlp_forward.1} parent=1 // pred_fallthru
      _
    // Predicated region
    $region14: #{mlp_forward.1} parent=1 // pred_check
      _
    $region15: #{mlp_forward.1} parent=1 // pred_check_branch
      %30 = sbr.rel (0) target = $region17
    $region16: #{mlp_forward.1} parent=1 // pred_region
      %s32 = ssub.s32 4096, 4096
      %33 = vsyncadd [#allocation6], %s32
      %s34 = sshll.u32 [#allocation5], 4
      %s35 = int_to_ptr.vmem [resolvable:$true] %s34
      %40 = dma.hbm_to_vmem [thread:$0]  %s3, 4096, %s35, [#allocation6], 64, 64, 4
    $region17: #{mlp_forward.1} parent=1 // pred_fallthru
      _
    // Predicated region
    $region18: #{mlp_forward.1} parent=1 // pred_check
      _
    $region19: #{mlp_forward.1} parent=1 // pred_check_branch
      %42 = sbr.rel (0) target = $region21
    $region20: #{mlp_forward.1} parent=1 // pred_region
      _
    $region21: #{mlp_forward.1} parent=1 // pred_fallthru
      _
    // Predicated region
    $region22: #{mlp_forward.1} parent=1 // pred_check
      _
    $region23: #{mlp_forward.1} parent=1 // pred_check_branch
      %44 = sbr.rel (0) target = $region25
    $region24: #{mlp_forward.1} parent=1 // pred_region
      %45 = dma.done [#allocation3], 4096
    $region25: #{mlp_forward.1} parent=1 // pred_fallthru
      _
    // Predicated region
    $region26: #{mlp_forward.1} parent=1 // pred_check
      _
    $region27: #{mlp_forward.1} parent=1 // pred_check_branch
      %47 = sbr.rel (0) target = $region29
    $region28: #{mlp_forward.1} parent=1 // pred_region
      %48 = dma.done [#allocation6], 4096
    $region29: #{mlp_forward.1} parent=1 // pred_fallthru
      _
    %v50 = vld [vmem:[%s0] sm:$0xf]
    %v51 = vld [vmem:[%s0 + $0x4] sm:$0xf]
    %v52 = vld [vmem:[#allocation2] sm:$0xff]
    %v53 = vld [vmem:[#allocation2 + $0x8] sm:$0xff]
    %v54 = vld [vmem:[#allocation2 + $0x10] sm:$0xff]
    %v55 = vld [vmem:[#allocation2 + $0x18] sm:$0xff]
    %v56 = vld [vmem:[#allocation2 + $0x20] sm:$0xff]
    %v57 = vld [vmem:[#allocation2 + $0x28] sm:$0xff]
    %v58 = vld [vmem:[#allocation2 + $0x30] sm:$0xff]
    %v59 = vld [vmem:[#allocation2 + $0x38] sm:$0xff]
    %v60 = vld [vmem:[#allocation2 + $0x40] sm:$0xff]
    %v61 = vld [vmem:[#allocation2 + $0x48] sm:$0xff]
    %v62 = vld [vmem:[#allocation2 + $0x50] sm:$0xff]
    %v63 = vld [vmem:[#allocation2 + $0x58] sm:$0xff]
    %v64 = vld [vmem:[#allocation2 + $0x60] sm:$0xff]
    %v65 = vld [vmem:[#allocation2 + $0x68] sm:$0xff]
    %v66 = vld [vmem:[#allocation2 + $0x70] sm:$0xff]
    %v67 = vld [vmem:[#allocation2 + $0x78] sm:$0xff]
    %v68 = vld [vmem:[#allocation2 + $0x80] sm:$0xff]
    %v69 = vld [vmem:[#allocation2 + $0x88] sm:$0xff]
    %v70 = vld [vmem:[#allocation2 + $0x90] sm:$0xff]
    %v71 = vld [vmem:[#allocation2 + $0x98] sm:$0xff]
    %v72 = vld [vmem:[#allocation2 + $0xa0] sm:$0xff]
    %v73 = vld [vmem:[#allocation2 + $0xa8] sm:$0xff]
    %v74 = vld [vmem:[#allocation2 + $0xb0] sm:$0xff]
    %v75 = vld [vmem:[#allocation2 + $0xb8] sm:$0xff]
    %v76 = vld [vmem:[#allocation2 + $0xc0] sm:$0xff]
    %v77 = vld [vmem:[#allocation2 + $0xc8] sm:$0xff]
    %v78 = vld [vmem:[#allocation2 + $0xd0] sm:$0xff]
    %v79 = vld [vmem:[#allocation2 + $0xd8] sm:$0xff]
    %v80 = vld [vmem:[#allocation2 + $0xe0] sm:$0xff]
    %v81 = vld [vmem:[#allocation2 + $0xe8] sm:$0xff]
    %v82 = vld [vmem:[#allocation2 + $0xf0] sm:$0xff]
    %v83 = vld [vmem:[#allocation2 + $0xf8] sm:$0xff]
    %v84 = vld [vmem:[%s2] sm:$0xf]
    %v86 = vlaneseq
    %v87 = vshrl.u32 %v86, 7
    %v88 = vsub.s32 0, %v87
    %v89 = vrot.slane %v84, %v88
    %v90 = vlaneseq
    %v91 = vshrl.u32 %v90, 7
    %v92 = vsub.s32 1, %v91
    %v93 = vrot.slane %v84, %v92
    %v94 = vlaneseq
    %v95 = vshrl.u32 %v94, 7
    %v96 = vsub.s32 2, %v95
    %v97 = vrot.slane %v84, %v96
    %v98 = vlaneseq
    %v99 = vshrl.u32 %v98, 7
    %v100 = vsub.s32 3, %v99
    %v101 = vrot.slane %v84, %v100
    %v108 = vunpack.c.l.b16 %v50
    %v109 = vunpack.c.l.b16 %v51
    %v110 = vpack.c.b16 %v109, %v108
    %v144 = vunpack.c.l.b16 %v52
    %v145 = vunpack.c.h.b16 %v52
    %v146 = vunpack.c.l.b16 %v53
    %v147 = vunpack.c.h.b16 %v53
    %v148 = vunpack.c.l.b16 %v54
    %v149 = vunpack.c.h.b16 %v54
    %v150 = vunpack.c.l.b16 %v55
    %v151 = vunpack.c.h.b16 %v55
    %v152 = vunpack.c.l.b16 %v56
    %v153 = vunpack.c.h.b16 %v56
    %v154 = vunpack.c.l.b16 %v57
    %v155 = vunpack.c.h.b16 %v57
    %v156 = vunpack.c.l.b16 %v58
    %v157 = vunpack.c.h.b16 %v58
    %v158 = vunpack.c.l.b16 %v59
    %v159 = vunpack.c.h.b16 %v59
    %v160 = vunpack.c.l.b16 %v60
    %v161 = vunpack.c.h.b16 %v60
    %v162 = vunpack.c.l.b16 %v61
    %v163 = vunpack.c.h.b16 %v61
    %v164 = vunpack.c.l.b16 %v62
    %v165 = vunpack.c.h.b16 %v62
    %v166 = vunpack.c.l.b16 %v63
    %v167 = vunpack.c.h.b16 %v63
    %v168 = vunpack.c.l.b16 %v64
    %v169 = vunpack.c.h.b16 %v64
    %v170 = vunpack.c.l.b16 %v65
    %v171 = vunpack.c.h.b16 %v65
    %v172 = vunpack.c.l.b16 %v66
    %v173 = vunpack.c.h.b16 %v66
    %v174 = vunpack.c.l.b16 %v67
    %v175 = vunpack.c.h.b16 %v67
    %v176 = vunpack.c.l.b16 %v68
    %v177 = vunpack.c.h.b16 %v68
    %v178 = vunpack.c.l.b16 %v69
    %v179 = vunpack.c.h.b16 %v69
    %v180 = vunpack.c.l.b16 %v70
    %v181 = vunpack.c.h.b16 %v70
    %v182 = vunpack.c.l.b16 %v71
    %v183 = vunpack.c.h.b16 %v71
    %v184 = vunpack.c.l.b16 %v72
    %v185 = vunpack.c.h.b16 %v72
    %v186 = vunpack.c.l.b16 %v73
    %v187 = vunpack.c.h.b16 %v73
    %v188 = vunpack.c.l.b16 %v74
    %v189 = vunpack.c.h.b16 %v74
    %v190 = vunpack.c.l.b16 %v75
    %v191 = vunpack.c.h.b16 %v75
    %v192 = vunpack.c.l.b16 %v76
    %v193 = vunpack.c.h.b16 %v76
    %v194 = vunpack.c.l.b16 %v77
    %v195 = vunpack.c.h.b16 %v77
    %v196 = vunpack.c.l.b16 %v78
    %v197 = vunpack.c.h.b16 %v78
    %v198 = vunpack.c.l.b16 %v79
    %v199 = vunpack.c.h.b16 %v79
    %v200 = vunpack.c.l.b16 %v80
    %v201 = vunpack.c.h.b16 %v80
    %v202 = vunpack.c.l.b16 %v81
    %v203 = vunpack.c.h.b16 %v81
    %v204 = vunpack.c.l.b16 %v82
    %v205 = vunpack.c.h.b16 %v82
    %v206 = vunpack.c.l.b16 %v83
    %v207 = vunpack.c.h.b16 %v83
    %v208 = vpack.c.b16 %v148, %v144
    %v209 = vpack.c.b16 %v149, %v145
    %v210 = vpack.c.b16 %v150, %v146
    %v211 = vpack.c.b16 %v151, %v147
    %v212 = vpack.c.b16 %v156, %v152
    %v213 = vpack.c.b16 %v157, %v153
    %v214 = vpack.c.b16 %v158, %v154
    %v215 = vpack.c.b16 %v159, %v155
    %v216 = vpack.c.b16 %v164, %v160
    %v217 = vpack.c.b16 %v165, %v161
    %v218 = vpack.c.b16 %v166, %v162
    %v219 = vpack.c.b16 %v167, %v163
    %v220 = vpack.c.b16 %v172, %v168
    %v221 = vpack.c.b16 %v173, %v169
    %v222 = vpack.c.b16 %v174, %v170
    %v223 = vpack.c.b16 %v175, %v171
    %v224 = vpack.c.b16 %v180, %v176
    %v225 = vpack.c.b16 %v181, %v177
    %v226 = vpack.c.b16 %v182, %v178
    %v227 = vpack.c.b16 %v183, %v179
    %v228 = vpack.c.b16 %v188, %v184
    %v229 = vpack.c.b16 %v189, %v185
    %v230 = vpack.c.b16 %v190, %v186
    %v231 = vpack.c.b16 %v191, %v187
    %v232 = vpack.c.b16 %v196, %v192
    %v233 = vpack.c.b16 %v197, %v193
    %v234 = vpack.c.b16 %v198, %v194
    %v235 = vpack.c.b16 %v199, %v195
    %v236 = vpack.c.b16 %v204, %v200
    %v237 = vpack.c.b16 %v205, %v201
    %v238 = vpack.c.b16 %v206, %v202
    %v239 = vpack.c.b16 %v207, %v203
    %272 = vmatprep.subr.bf16.mxu0 %v209
    %273 = vmatpush1.bf16.msra.mxu0 %v208
    %274 = vmatprep.subr.bf16.mxu0 %v213
    %275 = vmatpush1.bf16.msra.mxu0 %v212
    %276 = vmatprep.subr.bf16.mxu0 %v217
    %277 = vmatpush1.bf16.msra.mxu0 %v216
    %278 = vmatprep.subr.bf16.mxu0 %v221
    %279 = vmatpush1.bf16.msra.mxu0 %v220
    %280 = vmatprep.subr.bf16.mxu0 %v225
    %281 = vmatpush1.bf16.msra.mxu0 %v224
    %282 = vmatprep.subr.bf16.mxu0 %v229
    %283 = vmatpush1.bf16.msra.mxu0 %v228
    %284 = vmatprep.subr.bf16.mxu0 %v233
    %285 = vmatpush1.bf16.msra.mxu0 %v232
    %286 = vmatprep.subr.bf16.mxu0 %v237
    %287 = vmatpush1.bf16.msra.mxu0 %v236
    %288 = vmatprep.subr.bf16.mxu0 0
    %289 = vmatpush1.bf16.msra.mxu0 0
    %290 = vmatprep.subr.bf16.mxu0 0
    %291 = vmatpush1.bf16.msra.mxu0 0
    %292 = vmatprep.subr.bf16.mxu0 0
    %293 = vmatpush1.bf16.msra.mxu0 0
    %294 = vmatprep.subr.bf16.mxu0 0
    %295 = vmatpush1.bf16.msra.mxu0 0
    %296 = vmatprep.subr.bf16.mxu0 0
    %297 = vmatpush1.bf16.msra.mxu0 0
    %298 = vmatprep.subr.bf16.mxu0 0
    %299 = vmatpush1.bf16.msra.mxu0 0
    %300 = vmatprep.subr.bf16.mxu0 0
    %301 = vmatpush1.bf16.msra.mxu0 0
    %302 = vmatprep.subr.bf16.mxu0 0
    %303 = vmatpush1.bf16.msra.mxu0 0
    %304 = vmatprep.mubr.bf16.mxu0 0
    %305 = vmatmul.mubr.bf16.gmra.mrb[0].mxu0 %v110
    %v306 = vpop.f32.mrb[0].mxu0
    %v307 = vadd.f32 %v89, %v306
    %v308 = vpop.f32.mrb[0].mxu0
    %v309 = vadd.f32 %v93, %v308
    %v310 = vpop.f32.mrb[0].mxu0
    %v311 = vadd.f32 %v89, %v310
    %v312 = vpop.f32.mrb[0].mxu0
    %v313 = vadd.f32 %v93, %v312
    %314 = vdwg.mxu0
    %315 = vmatprep.subr.bf16.mxu0 %v211
    %316 = vmatpush1.bf16.msra.mxu0 %v210
    %317 = vmatprep.subr.bf16.mxu0 %v215
    %318 = vmatpush1.bf16.msra.mxu0 %v214
    %319 = vmatprep.subr.bf16.mxu0 %v219
    %320 = vmatpush1.bf16.msra.mxu0 %v218
    %321 = vmatprep.subr.bf16.mxu0 %v223
    %322 = vmatpush1.bf16.msra.mxu0 %v222
    %323 = vmatprep.subr.bf16.mxu0 %v227
    %324 = vmatpush1.bf16.msra.mxu0 %v226
    %325 = vmatprep.subr.bf16.mxu0 %v231
    %326 = vmatpush1.bf16.msra.mxu0 %v230
    %327 = vmatprep.subr.bf16.mxu0 %v235
    %328 = vmatpush1.bf16.msra.mxu0 %v234
    %329 = vmatprep.subr.bf16.mxu0 %v239
    %330 = vmatpush1.bf16.msra.mxu0 %v238
    %331 = vmatprep.subr.bf16.mxu0 0
    %332 = vmatpush1.bf16.msra.mxu0 0
    %333 = vmatprep.subr.bf16.mxu0 0
    %334 = vmatpush1.bf16.msra.mxu0 0
    %335 = vmatprep.subr.bf16.mxu0 0
    %336 = vmatpush1.bf16.msra.mxu0 0
    %337 = vmatprep.subr.bf16.mxu0 0
    %338 = vmatpush1.bf16.msra.mxu0 0
    %339 = vmatprep.subr.bf16.mxu0 0
    %340 = vmatpush1.bf16.msra.mxu0 0
    %341 = vmatprep.subr.bf16.mxu0 0
    %342 = vmatpush1.bf16.msra.mxu0 0
    %343 = vmatprep.subr.bf16.mxu0 0
    %344 = vmatpush1.bf16.msra.mxu0 0
    %345 = vmatprep.subr.bf16.mxu0 0
    %346 = vmatpush1.bf16.msra.mxu0 0
    %347 = vmatprep.mubr.bf16.mxu0 0
    %348 = vmatmul.mubr.bf16.gmra.mrb[0].mxu0 %v110
    %v349 = vpop.f32.mrb[0].mxu0
    %v350 = vadd.f32 %v97, %v349
    %v351 = vpop.f32.mrb[0].mxu0
    %v352 = vadd.f32 %v101, %v351
    %v353 = vpop.f32.mrb[0].mxu0
    %v354 = vadd.f32 %v97, %v353
    %v355 = vpop.f32.mrb[0].mxu0
    %v356 = vadd.f32 %v101, %v355
    %357 = vdwg.mxu0
    %v358 = vmul.f32 %v307, 0.5
    %v359 = vmul.f32 %v309, 0.5
    %v360 = vmul.f32 %v350, 0.5
    %v361 = vmul.f32 %v352, 0.5
    %v362 = vmul.f32 %v311, 0.5
    %v363 = vmul.f32 %v313, 0.5
    %v364 = vmul.f32 %v354, 0.5
    %v365 = vmul.f32 %v356, 0.5
    %v366 = vmul.f32 %v307, 0.70710677
    %v367 = vmul.f32 %v309, 0.70710677
    %v368 = vmul.f32 %v350, 0.70710677
    %v369 = vmul.f32 %v352, 0.70710677
    %v370 = vmul.f32 %v311, 0.70710677
    %v371 = vmul.f32 %v313, 0.70710677
    %v372 = vmul.f32 %v354, 0.70710677
    %v373 = vmul.f32 %v356, 0.70710677
    %vm374 = vcmp.ge.f32.partialorder %v366, 0.0
    %vm375 = vcmp.ge.f32.partialorder %v367, 0.0
    %vm376 = vcmp.ge.f32.partialorder %v368, 0.0
    %vm377 = vcmp.ge.f32.partialorder %v369, 0.0
    %vm378 = vcmp.ge.f32.partialorder %v370, 0.0
    %vm379 = vcmp.ge.f32.partialorder %v371, 0.0
    %vm380 = vcmp.ge.f32.partialorder %v372, 0.0
    %vm381 = vcmp.ge.f32.partialorder %v373, 0.0
    %v382 = vsel %vm374, 1.0, -1.0
    %v383 = vsel %vm375, 1.0, -1.0
    %v384 = vsel %vm376, 1.0, -1.0
    %v385 = vsel %vm377, 1.0, -1.0
    %v386 = vsel %vm378, 1.0, -1.0
    %v387 = vsel %vm379, 1.0, -1.0
    %v388 = vsel %vm380, 1.0, -1.0
    %v389 = vsel %vm381, 1.0, -1.0
    %v390 = vand.u32 2147483647, %v366
    %v391 = vand.u32 2147483647, %v367
    %v392 = vand.u32 2147483647, %v368
    %v393 = vand.u32 2147483647, %v369
    %v394 = vand.u32 2147483647, %v370
    %v395 = vand.u32 2147483647, %v371
    %v396 = vand.u32 2147483647, %v372
    %v397 = vand.u32 2147483647, %v373
    %v398 = vmul.f32 %v390, 0.3275911
    %v399 = vmul.f32 %v391, 0.3275911
    %v400 = vmul.f32 %v392, 0.3275911
    %v401 = vmul.f32 %v393, 0.3275911
    %v402 = vmul.f32 %v394, 0.3275911
    %v403 = vmul.f32 %v395, 0.3275911
    %v404 = vmul.f32 %v396, 0.3275911
    %v405 = vmul.f32 %v397, 0.3275911
    %v406 = vadd.f32 %v398, 1.0
    %v407 = vadd.f32 %v399, 1.0
    %v408 = vadd.f32 %v400, 1.0
    %v409 = vadd.f32 %v401, 1.0
    %v410 = vadd.f32 %v402, 1.0
    %v411 = vadd.f32 %v403, 1.0
    %v412 = vadd.f32 %v404, 1.0
    %v413 = vadd.f32 %v405, 1.0
    %v414 = vrcp.pop %v406
    %v415 = vrcp.pop %v407
    %v416 = vrcp.pop %v408
    %v417 = vrcp.pop %v409
    %v418 = vrcp.pop %v410
    %v419 = vrcp.pop %v411
    %v420 = vrcp.pop %v412
    %v421 = vrcp.pop %v413
    %v422 = vmul.f32 %v414, 1.0614054
    %v423 = vmul.f32 %v415, 1.0614054
    %v424 = vmul.f32 %v416, 1.0614054
    %v425 = vmul.f32 %v417, 1.0614054
    %v426 = vmul.f32 %v418, 1.0614054
    %v427 = vmul.f32 %v419, 1.0614054
    %v428 = vmul.f32 %v420, 1.0614054
    %v429 = vmul.f32 %v421, 1.0614054
    %v430 = vadd.f32 %v422, -1.4531521
    %v431 = vadd.f32 %v423, -1.4531521
    %v432 = vadd.f32 %v424, -1.4531521
    %v433 = vadd.f32 %v425, -1.4531521
    %v434 = vadd.f32 %v426, -1.4531521
    %v435 = vadd.f32 %v427, -1.4531521
    %v436 = vadd.f32 %v428, -1.4531521
    %v437 = vadd.f32 %v429, -1.4531521
    %v438 = vmul.f32 %v430, %v414
    %v439 = vmul.f32 %v431, %v415
    %v440 = vmul.f32 %v432, %v416
    %v441 = vmul.f32 %v433, %v417
    %v442 = vmul.f32 %v434, %v418
    %v443 = vmul.f32 %v435, %v419
    %v444 = vmul.f32 %v436, %v420
    %v445 = vmul.f32 %v437, %v421
    %v446 = vadd.f32 %v438, 1.4214138
    %v447 = vadd.f32 %v439, 1.4214138
    %v448 = vadd.f32 %v440, 1.4214138
    %v449 = vadd.f32 %v441, 1.4214138
    %v450 = vadd.f32 %v442, 1.4214138
    %v451 = vadd.f32 %v443, 1.4214138
    %v452 = vadd.f32 %v444, 1.4214138
    %v453 = vadd.f32 %v445, 1.4214138
    %v454 = vmul.f32 %v446, %v414
    %v455 = vmul.f32 %v447, %v415
    %v456 = vmul.f32 %v448, %v416
    %v457 = vmul.f32 %v449, %v417
    %v458 = vmul.f32 %v450, %v418
    %v459 = vmul.f32 %v451, %v419
    %v460 = vmul.f32 %v452, %v420
    %v461 = vmul.f32 %v453, %v421
    %v462 = vadd.f32 %v454, -0.28449672
    %v463 = vadd.f32 %v455, -0.28449672
    %v464 = vadd.f32 %v456, -0.28449672
    %v465 = vadd.f32 %v457, -0.28449672
    %v466 = vadd.f32 %v458, -0.28449672
    %v467 = vadd.f32 %v459, -0.28449672
    %v468 = vadd.f32 %v460, -0.28449672
    %v469 = vadd.f32 %v461, -0.28449672
    %v470 = vmul.f32 %v462, %v414
    %v471 = vmul.f32 %v463, %v415
    %v472 = vmul.f32 %v464, %v416
    %v473 = vmul.f32 %v465, %v417
    %v474 = vmul.f32 %v466, %v418
    %v475 = vmul.f32 %v467, %v419
    %v476 = vmul.f32 %v468, %v420
    %v477 = vmul.f32 %v469, %v421
    %v478 = vadd.f32 %v470, 0.2548296
    %v479 = vadd.f32 %v471, 0.2548296
    %v480 = vadd.f32 %v472, 0.2548296
    %v481 = vadd.f32 %v473, 0.2548296
    %v482 = vadd.f32 %v474, 0.2548296
    %v483 = vadd.f32 %v475, 0.2548296
    %v484 = vadd.f32 %v476, 0.2548296
    %v485 = vadd.f32 %v477, 0.2548296
    %v486 = vmul.f32 %v478, %v414
    %v487 = vmul.f32 %v479, %v415
    %v488 = vmul.f32 %v480, %v416
    %v489 = vmul.f32 %v481, %v417
    %v490 = vmul.f32 %v482, %v418
    %v491 = vmul.f32 %v483, %v419
    %v492 = vmul.f32 %v484, %v420
    %v493 = vmul.f32 %v485, %v421
    %v494 = vsub.f32 0.0, %v390
    %v495 = vsub.f32 0.0, %v391
    %v496 = vsub.f32 0.0, %v392
    %v497 = vsub.f32 0.0, %v393
    %v498 = vsub.f32 0.0, %v394
    %v499 = vsub.f32 0.0, %v395
    %v500 = vsub.f32 0.0, %v396
    %v501 = vsub.f32 0.0, %v397
    %v502 = vmul.f32 %v494, %v390
    %v503 = vmul.f32 %v495, %v391
    %v504 = vmul.f32 %v496, %v392
    %v505 = vmul.f32 %v497, %v393
    %v506 = vmul.f32 %v498, %v394
    %v507 = vmul.f32 %v499, %v395
    %v508 = vmul.f32 %v500, %v396
    %v509 = vmul.f32 %v501, %v397
    %v510 = vmul.f32 %v502, 1.442695
    %v511 = vpow.pop %v510
    %v512 = vmul.f32 %v503, 1.442695
    %v513 = vpow.pop %v512
    %v514 = vmul.f32 %v504, 1.442695
    %v515 = vpow.pop %v514
    %v516 = vmul.f32 %v505, 1.442695
    %v517 = vpow.pop %v516
    %v518 = vmul.f32 %v506, 1.442695
    %v519 = vpow.pop %v518
    %v520 = vmul.f32 %v507, 1.442695
    %v521 = vpow.pop %v520
    %v522 = vmul.f32 %v508, 1.442695
    %v523 = vpow.pop %v522
    %v524 = vmul.f32 %v509, 1.442695
    %v525 = vpow.pop %v524
    %v526 = vmul.f32 %v486, %v511
    %v527 = vmul.f32 %v487, %v513
    %v528 = vmul.f32 %v488, %v515
    %v529 = vmul.f32 %v489, %v517
    %v530 = vmul.f32 %v490, %v519
    %v531 = vmul.f32 %v491, %v521
    %v532 = vmul.f32 %v492, %v523
    %v533 = vmul.f32 %v493, %v525
    %v534 = vsub.f32 1.0, %v526
    %v535 = vsub.f32 1.0, %v527
    %v536 = vsub.f32 1.0, %v528
    %v537 = vsub.f32 1.0, %v529
    %v538 = vsub.f32 1.0, %v530
    %v539 = vsub.f32 1.0, %v531
    %v540 = vsub.f32 1.0, %v532
    %v541 = vsub.f32 1.0, %v533
    %v542 = vmul.f32 %v382, %v534
    %v543 = vmul.f32 %v383, %v535
    %v544 = vmul.f32 %v384, %v536
    %v545 = vmul.f32 %v385, %v537
    %v546 = vmul.f32 %v386, %v538
    %v547 = vmul.f32 %v387, %v539
    %v548 = vmul.f32 %v388, %v540
    %v549 = vmul.f32 %v389, %v541
    %v550 = vadd.f32 %v542, 1.0
    %v551 = vadd.f32 %v543, 1.0
    %v552 = vadd.f32 %v544, 1.0
    %v553 = vadd.f32 %v545, 1.0
    %v554 = vadd.f32 %v546, 1.0
    %v555 = vadd.f32 %v547, 1.0
    %v556 = vadd.f32 %v548, 1.0
    %v557 = vadd.f32 %v549, 1.0
    %v558 = vmul.f32 %v358, %v550
    %v559 = vmul.f32 %v359, %v551
    %v560 = vmul.f32 %v360, %v552
    %v561 = vmul.f32 %v361, %v553
    %v562 = vmul.f32 %v362, %v554
    %v563 = vmul.f32 %v363, %v555
    %v564 = vmul.f32 %v364, %v556
    %v565 = vmul.f32 %v365, %v557
    %v566 = vpack.c.bf16 %v562, %v558
    %v567 = vpack.c.bf16 %v563, %v559
    %v568 = vpack.c.bf16 %v564, %v560
    %v569 = vpack.c.bf16 %v565, %v561
    %v570 = vld [vmem:[#allocation5] sm:$0xf]
    %v571 = vld [vmem:[#allocation5 + $0x4] sm:$0xf]
    %v572 = vld [vmem:[#allocation5 + $0x8] sm:$0xf]
    %v573 = vld [vmem:[#allocation5 + $0xc] sm:$0xf]
    %v574 = vld [vmem:[#allocation5 + $0x10] sm:$0xf]
    %v575 = vld [vmem:[#allocation5 + $0x14] sm:$0xf]
    %v576 = vld [vmem:[#allocation5 + $0x18] sm:$0xf]
    %v577 = vld [vmem:[#allocation5 + $0x1c] sm:$0xf]
    %v578 = vld [vmem:[#allocation5 + $0x20] sm:$0xf]
    %v579 = vld [vmem:[#allocation5 + $0x24] sm:$0xf]
    %v580 = vld [vmem:[#allocation5 + $0x28] sm:$0xf]
    %v581 = vld [vmem:[#allocation5 + $0x2c] sm:$0xf]
    %v582 = vld [vmem:[#allocation5 + $0x30] sm:$0xf]
    %v583 = vld [vmem:[#allocation5 + $0x34] sm:$0xf]
    %v584 = vld [vmem:[#allocation5 + $0x38] sm:$0xf]
    %v585 = vld [vmem:[#allocation5 + $0x3c] sm:$0xf]
    %v586 = vld [vmem:[#allocation5 + $0x40] sm:$0xf]
    %v587 = vld [vmem:[#allocation5 + $0x44] sm:$0xf]
    %v588 = vld [vmem:[#allocation5 + $0x48] sm:$0xf]
    %v589 = vld [vmem:[#allocation5 + $0x4c] sm:$0xf]
    %v590 = vld [vmem:[#allocation5 + $0x50] sm:$0xf]
    %v591 = vld [vmem:[#allocation5 + $0x54] sm:$0xf]
    %v592 = vld [vmem:[#allocation5 + $0x58] sm:$0xf]
    %v593 = vld [vmem:[#allocation5 + $0x5c] sm:$0xf]
    %v594 = vld [vmem:[#allocation5 + $0x60] sm:$0xf]
    %v595 = vld [vmem:[#allocation5 + $0x64] sm:$0xf]
    %v596 = vld [vmem:[#allocation5 + $0x68] sm:$0xf]
    %v597 = vld [vmem:[#allocation5 + $0x6c] sm:$0xf]
    %v598 = vld [vmem:[#allocation5 + $0x70] sm:$0xf]
    %v599 = vld [vmem:[#allocation5 + $0x74] sm:$0xf]
    %v600 = vld [vmem:[#allocation5 + $0x78] sm:$0xf]
    %v601 = vld [vmem:[#allocation5 + $0x7c] sm:$0xf]
    %v602 = vld [vmem:[#allocation5 + $0x80] sm:$0xf]
    %v603 = vld [vmem:[#allocation5 + $0x84] sm:$0xf]
    %v604 = vld [vmem:[#allocation5 + $0x88] sm:$0xf]
    %v605 = vld [vmem:[#allocation5 + $0x8c] sm:$0xf]
    %v606 = vld [vmem:[#allocation5 + $0x90] sm:$0xf]
    %v607 = vld [vmem:[#allocation5 + $0x94] sm:$0xf]
    %v608 = vld [vmem:[#allocation5 + $0x98] sm:$0xf]
    %v609 = vld [vmem:[#allocation5 + $0x9c] sm:$0xf]
    %v610 = vld [vmem:[#allocation5 + $0xa0] sm:$0xf]
    %v611 = vld [vmem:[#allocation5 + $0xa4] sm:$0xf]
    %v612 = vld [vmem:[#allocation5 + $0xa8] sm:$0xf]
    %v613 = vld [vmem:[#allocation5 + $0xac] sm:$0xf]
    %v614 = vld [vmem:[#allocation5 + $0xb0] sm:$0xf]
    %v615 = vld [vmem:[#allocation5 + $0xb4] sm:$0xf]
    %v616 = vld [vmem:[#allocation5 + $0xb8] sm:$0xf]
    %v617 = vld [vmem:[#allocation5 + $0xbc] sm:$0xf]
    %v618 = vld [vmem:[#allocation5 + $0xc0] sm:$0xf]
    %v619 = vld [vmem:[#allocation5 + $0xc4] sm:$0xf]
    %v620 = vld [vmem:[#allocation5 + $0xc8] sm:$0xf]
    %v621 = vld [vmem:[#allocation5 + $0xcc] sm:$0xf]
    %v622 = vld [vmem:[#allocation5 + $0xd0] sm:$0xf]
    %v623 = vld [vmem:[#allocation5 + $0xd4] sm:$0xf]
    %v624 = vld [vmem:[#allocation5 + $0xd8] sm:$0xf]
    %v625 = vld [vmem:[#allocation5 + $0xdc] sm:$0xf]
    %v626 = vld [vmem:[#allocation5 + $0xe0] sm:$0xf]
    %v627 = vld [vmem:[#allocation5 + $0xe4] sm:$0xf]
    %v628 = vld [vmem:[#allocation5 + $0xe8] sm:$0xf]
    %v629 = vld [vmem:[#allocation5 + $0xec] sm:$0xf]
    %v630 = vld [vmem:[#allocation5 + $0xf0] sm:$0xf]
    %v631 = vld [vmem:[#allocation5 + $0xf4] sm:$0xf]
    %v632 = vld [vmem:[#allocation5 + $0xf8] sm:$0xf]
    %v633 = vld [vmem:[#allocation5 + $0xfc] sm:$0xf]
    %v634 = vld [vmem:[%s4] sm:$0x1]
    %v636 = vlaneseq
    %v637 = vshrl.u32 %v636, 7
    %v638 = vsub.s32 0, %v637
    %v639 = vrot.slane %v634, %v638
    %v705 = vunpack.c.l.b16 %v570
    %v706 = vunpack.c.l.b16 %v571
    %v707 = vunpack.c.l.b16 %v572
    %v708 = vunpack.c.l.b16 %v573
    %v709 = vunpack.c.l.b16 %v574
    %v710 = vunpack.c.l.b16 %v575
    %v711 = vunpack.c.l.b16 %v576
    %v712 = vunpack.c.l.b16 %v577
    %v713 = vunpack.c.l.b16 %v578
    %v714 = vunpack.c.l.b16 %v579
    %v715 = vunpack.c.l.b16 %v580
    %v716 = vunpack.c.l.b16 %v581
    %v717 = vunpack.c.l.b16 %v582
    %v718 = vunpack.c.l.b16 %v583
    %v719 = vunpack.c.l.b16 %v584
    %v720 = vunpack.c.l.b16 %v585
    %v721 = vunpack.c.l.b16 %v586
    %v722 = vunpack.c.l.b16 %v587
    %v723 = vunpack.c.l.b16 %v588
    %v724 = vunpack.c.l.b16 %v589
    %v725 = vunpack.c.l.b16 %v590
    %v726 = vunpack.c.l.b16 %v591
    %v727 = vunpack.c.l.b16 %v592
    %v728 = vunpack.c.l.b16 %v593
    %v729 = vunpack.c.l.b16 %v594
    %v730 = vunpack.c.l.b16 %v595
    %v731 = vunpack.c.l.b16 %v596
    %v732 = vunpack.c.l.b16 %v597
    %v733 = vunpack.c.l.b16 %v598
    %v734 = vunpack.c.l.b16 %v599
    %v735 = vunpack.c.l.b16 %v600
    %v736 = vunpack.c.l.b16 %v601
    %v737 = vunpack.c.l.b16 %v602
    %v738 = vunpack.c.l.b16 %v603
    %v739 = vunpack.c.l.b16 %v604
    %v740 = vunpack.c.l.b16 %v605
    %v741 = vunpack.c.l.b16 %v606
    %v742 = vunpack.c.l.b16 %v607
    %v743 = vunpack.c.l.b16 %v608
    %v744 = vunpack.c.l.b16 %v609
    %v745 = vunpack.c.l.b16 %v610
    %v746 = vunpack.c.l.b16 %v611
    %v747 = vunpack.c.l.b16 %v612
    %v748 = vunpack.c.l.b16 %v613
    %v749 = vunpack.c.l.b16 %v614
    %v750 = vunpack.c.l.b16 %v615
    %v751 = vunpack.c.l.b16 %v616
    %v752 = vunpack.c.l.b16 %v617
    %v753 = vunpack.c.l.b16 %v618
    %v754 = vunpack.c.l.b16 %v619
    %v755 = vunpack.c.l.b16 %v620
    %v756 = vunpack.c.l.b16 %v621
    %v757 = vunpack.c.l.b16 %v622
    %v758 = vunpack.c.l.b16 %v623
    %v759 = vunpack.c.l.b16 %v624
    %v760 = vunpack.c.l.b16 %v625
    %v761 = vunpack.c.l.b16 %v626
    %v762 = vunpack.c.l.b16 %v627
    %v763 = vunpack.c.l.b16 %v628
    %v764 = vunpack.c.l.b16 %v629
    %v765 = vunpack.c.l.b16 %v630
    %v766 = vunpack.c.l.b16 %v631
    %v767 = vunpack.c.l.b16 %v632
    %v768 = vunpack.c.l.b16 %v633
    %v769 = vpack.c.b16 %v706, %v705
    %v770 = vpack.c.b16 %v708, %v707
    %v771 = vpack.c.b16 %v710, %v709
    %v772 = vpack.c.b16 %v712, %v711
    %v773 = vpack.c.b16 %v714, %v713
    %v774 = vpack.c.b16 %v716, %v715
    %v775 = vpack.c.b16 %v718, %v717
    %v776 = vpack.c.b16 %v720, %v719
    %v777 = vpack.c.b16 %v722, %v721
    %v778 = vpack.c.b16 %v724, %v723
    %v779 = vpack.c.b16 %v726, %v725
    %v780 = vpack.c.b16 %v728, %v727
    %v781 = vpack.c.b16 %v730, %v729
    %v782 = vpack.c.b16 %v732, %v731
    %v783 = vpack.c.b16 %v734, %v733
    %v784 = vpack.c.b16 %v736, %v735
    %v785 = vpack.c.b16 %v738, %v737
    %v786 = vpack.c.b16 %v740, %v739
    %v787 = vpack.c.b16 %v742, %v741
    %v788 = vpack.c.b16 %v744, %v743
    %v789 = vpack.c.b16 %v746, %v745
    %v790 = vpack.c.b16 %v748, %v747
    %v791 = vpack.c.b16 %v750, %v749
    %v792 = vpack.c.b16 %v752, %v751
    %v793 = vpack.c.b16 %v754, %v753
    %v794 = vpack.c.b16 %v756, %v755
    %v795 = vpack.c.b16 %v758, %v757
    %v796 = vpack.c.b16 %v760, %v759
    %v797 = vpack.c.b16 %v762, %v761
    %v798 = vpack.c.b16 %v764, %v763
    %v799 = vpack.c.b16 %v766, %v765
    %v800 = vpack.c.b16 %v768, %v767
    %833 = vmatprep.subr.bf16.mxu0 0
    %834 = vmatpush1.bf16.msra.mxu0 %v769
    %835 = vmatprep.subr.bf16.mxu0 0
    %836 = vmatpush1.bf16.msra.mxu0 %v770
    %837 = vmatprep.subr.bf16.mxu0 0
    %838 = vmatpush1.bf16.msra.mxu0 %v771
    %839 = vmatprep.subr.bf16.mxu0 0
    %840 = vmatpush1.bf16.msra.mxu0 %v772
    %841 = vmatprep.subr.bf16.mxu0 0
    %842 = vmatpush1.bf16.msra.mxu0 %v773
    %843 = vmatprep.subr.bf16.mxu0 0
    %844 = vmatpush1.bf16.msra.mxu0 %v774
    %845 = vmatprep.subr.bf16.mxu0 0
    %846 = vmatpush1.bf16.msra.mxu0 %v775
    %847 = vmatprep.subr.bf16.mxu0 0
    %848 = vmatpush1.bf16.msra.mxu0 %v776
    %849 = vmatprep.subr.bf16.mxu0 0
    %850 = vmatpush1.bf16.msra.mxu0 %v777
    %851 = vmatprep.subr.bf16.mxu0 0
    %852 = vmatpush1.bf16.msra.mxu0 %v778
    %853 = vmatprep.subr.bf16.mxu0 0
    %854 = vmatpush1.bf16.msra.mxu0 %v779
    %855 = vmatprep.subr.bf16.mxu0 0
    %856 = vmatpush1.bf16.msra.mxu0 %v780
    %857 = vmatprep.subr.bf16.mxu0 0
    %858 = vmatpush1.bf16.msra.mxu0 %v781
    %859 = vmatprep.subr.bf16.mxu0 0
    %860 = vmatpush1.bf16.msra.mxu0 %v782
    %861 = vmatprep.subr.bf16.mxu0 0
    %862 = vmatpush1.bf16.msra.mxu0 %v783
    %863 = vmatprep.subr.bf16.mxu0 0
    %864 = vmatpush1.bf16.msra.mxu0 %v784
    %865 = vmatprep.mubr.bf16.mxu0 %v567
    %866 = vmatmul.mubr.bf16.gmra.mrb[0].mxu0 %v566
    %v867 = vpop.f32.mrb[0].mxu0
    %v868 = vadd.f32 %v639, %v867
    %v869 = vpop.f32.mrb[0].mxu0
    %v870 = vpop.f32.mrb[0].mxu0
    %v871 = vadd.f32 %v639, %v870
    %v872 = vpop.f32.mrb[0].mxu0
    %873 = vdwg.mxu0
    %874 = vmatprep.subr.bf16.mxu0 0
    %875 = vmatpush1.bf16.msra.mxu0 %v785
    %876 = vmatprep.subr.bf16.mxu0 0
    %877 = vmatpush1.bf16.msra.mxu0 %v786
    %878 = vmatprep.subr.bf16.mxu0 0
    %879 = vmatpush1.bf16.msra.mxu0 %v787
    %880 = vmatprep.subr.bf16.mxu0 0
    %881 = vmatpush1.bf16.msra.mxu0 %v788
    %882 = vmatprep.subr.bf16.mxu0 0
    %883 = vmatpush1.bf16.msra.mxu0 %v789
    %884 = vmatprep.subr.bf16.mxu0 0
    %885 = vmatpush1.bf16.msra.mxu0 %v790
    %886 = vmatprep.subr.bf16.mxu0 0
    %887 = vmatpush1.bf16.msra.mxu0 %v791
    %888 = vmatprep.subr.bf16.mxu0 0
    %889 = vmatpush1.bf16.msra.mxu0 %v792
    %890 = vmatprep.subr.bf16.mxu0 0
    %891 = vmatpush1.bf16.msra.mxu0 %v793
    %892 = vmatprep.subr.bf16.mxu0 0
    %893 = vmatpush1.bf16.msra.mxu0 %v794
    %894 = vmatprep.subr.bf16.mxu0 0
    %895 = vmatpush1.bf16.msra.mxu0 %v795
    %896 = vmatprep.subr.bf16.mxu0 0
    %897 = vmatpush1.bf16.msra.mxu0 %v796
    %898 = vmatprep.subr.bf16.mxu0 0
    %899 = vmatpush1.bf16.msra.mxu0 %v797
    %900 = vmatprep.subr.bf16.mxu0 0
    %901 = vmatpush1.bf16.msra.mxu0 %v798
    %902 = vmatprep.subr.bf16.mxu0 0
    %903 = vmatpush1.bf16.msra.mxu0 %v799
    %904 = vmatprep.subr.bf16.mxu0 0
    %905 = vmatpush1.bf16.msra.mxu0 %v800
    %906 = vmatprep.mubr.bf16.mxu0 %v569
    %907 = vmatmul.mubr.bf16.gmra.mrb[0].mxu0 %v568
    %v908 = vpop.f32.mrb[0].mxu0
    %v909 = vadd.f32 %v868, %v908
    %v910 = vpop.f32.mrb[0].mxu0
    %v911 = vpop.f32.mrb[0].mxu0
    %v912 = vadd.f32 %v871, %v911
    %v913 = vpop.f32.mrb[0].mxu0
    %914 = vdwg.mxu0
    %915 = vst [vmem:[#allocation7] sm:$0xff] %v909
    %916 = vst [vmem:[#allocation7 + $0x8] sm:$0xff] %v912
    // Predicated region
    $region30: #{mlp_forward.1} parent=1 // pred_check
      _
    $region31: #{mlp_forward.1} parent=1 // pred_check_branch
      %918 = sbr.rel (0) target = $region33
    $region32: #{mlp_forward.1} parent=1 // pred_region
      %s920 = ssub.s32 256, 256
      %921 = vsyncadd [#allocation4], %s920
      %s922 = sshll.u32 [#allocation7], 4
      %s923 = int_to_ptr.vmem [resolvable:$true] %s922
      %928 = dma.vmem_to_hbm [thread:$0]  %s923, 256, %s5, [#allocation4], 128, 128, 8
    $region33: #{mlp_forward.1} parent=1 // pred_fallthru
      _
    // Predicated region
    $region34: #{mlp_forward.1} parent=1 // pred_check
      _
    $region35: #{mlp_forward.1} parent=1 // pred_check_branch
      %930 = sbr.rel (0) target = $region37
    $region36: #{mlp_forward.1} parent=1 // pred_region
      %931 = dma.done [#allocation4], 256
    $region37: #{mlp_forward.1} parent=1 // pred_fallthru
      _
    %932 = vsyncpa [#allocation3], 1
    %933 = vsyncpa [#allocation6], 1
    %934 = vsyncpa [#allocation4], 1

</llo_original>
